<compile_context>
chip_gen: v6e
topology: v6e:2x2x1
jax: 0.10.0
libtpu: 0.0.40
codegen_flags: <defaults>
</compile_context>

<pallas_src>
import functools

import jax
import jax.numpy as jnp
from jax.experimental import pallas as pl
from jax.experimental.pallas import tpu as pltpu


# --------------------------------------------------------------------------
# Kernels
# --------------------------------------------------------------------------
def _packed_kernel(has_fused0, fc_rest, x_ref, w1_ref, b1_ref, *rest):
    """Both branches packed as one [rows, 2*dim1] activation (dim1 <= 128).

    rest layout (all optional pieces are statically present/absent):
      [w0, b0]  if has_fused0        fused layer-0 weight  [dim1, 2*dim1]
      [wbd,bbd] if fc_rest > 0       block-diag hidden wts [fc_rest, 2*dim1, 2*dim1]
      wh, bh, out_ref                stacked head + fused output block
    """
    refs = list(rest)
    if has_fused0:
        w0_ref, b0_ref = refs[0], refs[1]
        refs = refs[2:]
    if fc_rest > 0:
        wbd_ref, bbd_ref = refs[0], refs[1]
        refs = refs[2:]
    wh_ref, bh_ref, out_ref = refs

    mm = w1_ref.dtype            # matmul input dtype (bf16 or f32)
    f32 = jnp.float32

    # Shared trunk (x already in mm dtype, cast wrapper-side).
    z = jnp.dot(x_ref[...], w1_ref[...], preferred_element_type=f32) + b1_ref[...]
    z = jnp.maximum(z, 0.0)

    # Fused first hidden layer of BOTH branches: one [dim1, 2*dim1] matmul.
    if has_fused0:
        z = jnp.dot(z.astype(mm), w0_ref[...], preferred_element_type=f32) + b0_ref[...]
        z = jnp.maximum(z, 0.0)

    # Remaining hidden layers: block-diagonal diag(wd[i], ws[i]) -> ONE matmul
    # per layer on the packed [rows, 2*dim1] activation.
    for i in range(fc_rest):     # static -> unrolled
        z = jnp.dot(z.astype(mm), wbd_ref[i], preferred_element_type=f32) + bbd_ref[i]
        z = jnp.maximum(z, 0.0)

    # Stacked output head: dos columns [:out_dim], scaling column [out_dim].
    y = jnp.dot(z.astype(mm), wh_ref[...], preferred_element_type=f32) + bh_ref[...]
    out_ref[...] = y.astype(out_ref.dtype)


def _split_kernel(fc_count, x_ref, w1_ref, b1_ref,
                  wd_ref, bd_ref, ws_ref, bs_ref,
                  whd_ref, whs_ref, bh_ref, out_ref):
    """Fallback for dim1 > 128: branches kept separate (no block-diag)."""
    mm = w1_ref.dtype
    f32 = jnp.float32

    h = jnp.dot(x_ref[...], w1_ref[...], preferred_element_type=f32) + b1_ref[...]
    h = jnp.maximum(h, 0.0)

    dos = h
    scal = h
    for i in range(fc_count):    # static -> unrolled
        dos = jnp.maximum(
            jnp.dot(dos.astype(mm), wd_ref[i], preferred_element_type=f32) + bd_ref[i], 0.0)
        scal = jnp.maximum(
            jnp.dot(scal.astype(mm), ws_ref[i], preferred_element_type=f32) + bs_ref[i], 0.0)

    y = (jnp.dot(dos.astype(mm), whd_ref[...], preferred_element_type=f32)
         + jnp.dot(scal.astype(mm), whs_ref[...], preferred_element_type=f32)
         + bh_ref[...])
    out_ref[...] = y.astype(out_ref.dtype)


# --------------------------------------------------------------------------
# Wrapper
# --------------------------------------------------------------------------
def _vmem_capacity_bytes(default=64 << 20):
    """Physical VMEM capacity of the local TPU (safe default: 64 MiB / v7x)."""
    try:
        info = pltpu.get_tpu_info()
    except Exception:
        return default
    for name in ("vmem_capacity_bytes", "vmem_size_bytes", "vmem_bytes"):
        v = getattr(info, name, None)
        if v:
            return int(v)
    return default


def lmbtr_dos_forward(x, params, *, tile_rows=None, use_bf16=True, out_dtype=None):
    """LMBTR_DOS forward.

    x: [N, in_dim] float32
    params: dict with
      w1  [in_dim, dim1],   b1  [1, dim1]
      wd  [fc, dim1, dim1], bd  [fc, 1, dim1]
      wod [dim1, out_dim],  bod [1, out_dim]
      ws  [fc, dim1, dim1], bs  [fc, 1, dim1]
      wos [dim1, 1],        bos [1, 1]
    Returns (dos_out, scaling) with the PyTorch module's return shapes.
    """
    n, in_dim = x.shape
    w1 = params["w1"]
    dim1 = w1.shape[1]
    wd, bd = params["wd"], params["bd"]
    ws, bs = params["ws"], params["bs"]
    wod, bod = params["wod"], params["bod"]
    wos, bos = params["wos"], params["bos"]
    fc_count = wd.shape[0]
    out_dim = wod.shape[1]

    f32 = jnp.float32
    mm_dtype = jnp.bfloat16 if use_bf16 else jnp.float32
    if out_dtype is None:
        out_dtype = jnp.bfloat16 if use_bf16 else jnp.float32

    # Narrow, lightly padded fused output: [dos cols | scaling col | pad].
    out_total = out_dim + 1
    out_pad = max(8, ((out_total + 7) // 8) * 8)

    # Branch packing only pays off while both branches fit one MXU tile.
    pack_branches = (dim1 <= 128) or (fc_count == 0)

    # ---------------- row tiling ------------------------------------------
    if tile_rows is None:
        steps = max(1, pl.cdiv(n, 2048))        # big tiles: <=2048 rows/step
        if steps > 1 and steps % 2 == 1:
            steps += 1                          # even grid -> balanced v7x TCs
        tile_rows = max(16, pl.cdiv(pl.cdiv(n, steps), 16) * 16)
    sub = 16 if mm_dtype == jnp.bfloat16 else 8
    tile_rows = max(sub, pl.cdiv(tile_rows, sub) * sub)
    n_pad = pl.cdiv(n, tile_rows) * tile_rows
    grid = (n_pad // tile_rows,)

    # Streamed input in matmul dtype (halves x DMA + VMEM tile).
    x_in = x.astype(mm_dtype)
    if n_pad != n:
        x_in = jnp.pad(x_in, ((0, n_pad - n), (0, 0)))

    def row_map(i):
        return (i, 0)

    def c2(i):
        return (0, 0)

    def c3(i):
        return (0, 0, 0)

    in_specs = [
        pl.BlockSpec((tile_rows, in_dim), row_map),          # x (streamed)
        pl.BlockSpec((in_dim, dim1), c2),                    # w1
        pl.BlockSpec((1, dim1), c2),                         # b1
    ]
    args = [x_in, w1.astype(mm_dtype), params["b1"].astype(f32)]

    if pack_branches:
        has_fused0 = fc_count >= 1
        fc_rest = max(fc_count - 1, 0)

        if has_fused0:
            # Fused layer-0 of both branches (same LHS h).
            w0 = jnp.concatenate([wd[0], ws[0]], axis=1)     # [dim1, 2*dim1]
            b0 = jnp.concatenate([bd[0], bs[0]], axis=1)     # [1, 2*dim1]
            in_specs += [pl.BlockSpec((dim1, 2 * dim1), c2),
                         pl.BlockSpec((1, 2 * dim1), c2)]
            args += [w0.astype(mm_dtype), b0.astype(f32)]

        if fc_rest > 0:
            # Block-diagonal diag(wd[i], ws[i]) -> one matmul per layer.
            zpad = jnp.zeros((fc_rest, dim1, dim1), f32)
            wbd = jnp.concatenate(
                [jnp.concatenate([wd[1:].astype(f32), zpad], axis=2),
                 jnp.concatenate([zpad, ws[1:].astype(f32)], axis=2)], axis=1)
            bbd = jnp.concatenate([bd[1:], bs[1:]], axis=2)  # [fc_rest, 1, 2*dim1]
            in_specs += [pl.BlockSpec((fc_rest, 2 * dim1, 2 * dim1), c3),
                         pl.BlockSpec((fc_rest, 1, 2 * dim1), c3)]
            args += [wbd.astype(mm_dtype), bbd.astype(f32)]

        # Stacked head: rows [:dim1] carry wod (dos lanes), rows [dim1:] carry
        # wos (scaling lane).  One matmul, narrow lane-padded output.
        head_rows = 2 * dim1 if has_fused0 else dim1
        wh = jnp.zeros((head_rows, out_pad), f32)
        if has_fused0:
            wh = wh.at[:dim1, :out_dim].set(wod)
            wh = wh.at[dim1:, out_dim:out_total].set(wos)
        else:
            wh = wh.at[:, :out_dim].set(wod)
            wh = wh.at[:, out_dim:out_total].set(wos)
        bh = jnp.zeros((1, out_pad), f32)
        bh = bh.at[:, :out_dim].set(bod).at[:, out_dim:out_total].set(bos)
        in_specs += [pl.BlockSpec((head_rows, out_pad), c2),
                     pl.BlockSpec((1, out_pad), c2)]
        args += [wh.astype(mm_dtype), bh]

        kernel = functools.partial(_packed_kernel, has_fused0, fc_rest)
        act_width = 2 * dim1 if has_fused0 else dim1
    else:
        # dim1 > 128: branches kept separate; padded lane-aligned head.
        whd = jnp.zeros((dim1, out_pad), f32).at[:, :out_dim].set(wod)
        whs = jnp.zeros((dim1, out_pad), f32).at[:, out_dim:out_total].set(wos)
        bh = jnp.zeros((1, out_pad), f32)
        bh = bh.at[:, :out_dim].set(bod).at[:, out_dim:out_total].set(bos)
        in_specs += [pl.BlockSpec((fc_count, dim1, dim1), c3),
                     pl.BlockSpec((fc_count, 1, dim1), c3),
                     pl.BlockSpec((fc_count, dim1, dim1), c3),
                     pl.BlockSpec((fc_count, 1, dim1), c3),
                     pl.BlockSpec((dim1, out_pad), c2),
                     pl.BlockSpec((dim1, out_pad), c2),
                     pl.BlockSpec((1, out_pad), c2)]
        args += [wd.astype(mm_dtype), bd.astype(f32),
                 ws.astype(mm_dtype), bs.astype(f32),
                 whd.astype(mm_dtype), whs.astype(mm_dtype), bh]
        kernel = functools.partial(_split_kernel, fc_count)
        act_width = dim1

    # ---------------- VMEM budget (generation-aware) ------------------------
    weight_bytes = sum(int(a.size) * a.dtype.itemsize for a in args[1:])
    tile_bytes = (tile_rows * in_dim * x_in.dtype.itemsize            # x tile
                  + tile_rows * out_pad * jnp.dtype(out_dtype).itemsize  # out tile
                  + 3 * tile_rows * act_width * 4)                    # f32 intermediates
    vmem_need = 2 * (weight_bytes + tile_bytes) + (8 << 20)
    vmem_soft_cap = (_vmem_capacity_bytes() * 25) // 32   # ~78%: headroom on v7x (64 MiB)
    vmem_limit = int(min(max(vmem_need, 32 << 20), vmem_soft_cap))

    out = pl.pallas_call(
        kernel,
        out_shape=jax.ShapeDtypeStruct((n_pad, out_pad), out_dtype),
        grid_spec=pltpu.PrefetchScalarGridSpec(
            num_scalar_prefetch=0,
            grid=grid,
            in_specs=in_specs,
            out_specs=pl.BlockSpec((tile_rows, out_pad), row_map),
        ),
        compiler_params=pltpu.CompilerParams(
            dimension_semantics=("parallel",),
            vmem_limit_bytes=vmem_limit,
        ),
    )(*args)

    # Split / unpad the fused narrow output (wrapper-side layout plumbing).
    dos_out = out[:n, :out_dim].astype(f32)
    scaling = out[:n, out_dim].astype(f32)
    if out_dim == 1:
        return dos_out.reshape(-1), scaling
    return dos_out, scaling


# --------------------------------------------------------------------------
# Reference + demo
# --------------------------------------------------------------------------
def _init_params(key, in_dim, dim1, out_dim, fc_count):
    keys = jax.random.split(key, 12)

    def u(k, shape, fan_in):
        bound = 1.0 / jnp.sqrt(fan_in)
        return jax.random.uniform(k, shape, jnp.float32, -bound, bound)

    return {
        "w1": u(keys[0], (in_dim, dim1), in_dim),
        "b1": u(keys[1], (1, dim1), in_dim),
        "wd": u(keys[2], (fc_count, dim1, dim1), dim1),
        "bd": u(keys[3], (fc_count, 1, dim1), dim1),
        "wod": u(keys[4], (dim1, out_dim), dim1),
        "bod": u(keys[5], (1, out_dim), dim1),
        "ws": u(keys[6], (fc_count, dim1, dim1), dim1),
        "bs": u(keys[7], (fc_count, 1, dim1), dim1),
        "wos": u(keys[8], (dim1, 1), dim1),
        "bos": u(keys[9], (1, 1), dim1),
    }


def _reference_forward(x, p, mm_dtype=jnp.float32):
    """Pure-JAX reference mirroring the PyTorch forward.

    mm_dtype controls the matmul input dtype (f32 exact reference, bf16 to
    mirror the kernel's MXU-native matmuls); accumulation is always f32.
    """
    def lin(a, w, b):
        return jnp.dot(a.astype(mm_dtype), w.astype(mm_dtype),
                       preferred_element_type=jnp.float32) + b

    h = jax.nn.relu(lin(x, p["w1"], p["b1"]))
    dos = h
    for i in range(p["wd"].shape[0]):
        dos = jax.nn.relu(lin(dos, p["wd"][i], p["bd"][i]))
    dos = lin(dos, p["wod"], p["bod"])
    scal = h
    for i in range(p["ws"].shape[0]):
        scal = jax.nn.relu(lin(scal, p["ws"][i], p["bs"][i]))
    scal = lin(scal, p["wos"], p["bos"])
    if dos.shape[1] == 1:
        return dos.reshape(-1), scal.reshape(-1)
    return dos, scal.reshape(-1)


if __name__ == "__main__":
    # Module-consistent small shapes: N rows of extra_features_LMBTR with
    # feature dim 16, dim1 = 32, fc_count = 2, output_dim = 4.
    N, IN_DIM, DIM1, OUT_DIM, FC_COUNT = 40, 16, 32, 4, 2

    key = jax.random.PRNGKey(0)
    k_x, k_p = jax.random.split(key)
    x = jax.random.normal(k_x, (N, IN_DIM), jnp.float32)
    params = _init_params(k_p, IN_DIM, DIM1, OUT_DIM, FC_COUNT)

    dos_bf, scal_bf = _reference_forward(x, params, jnp.bfloat16)
    dos_f32, scal_f32 = _reference_forward(x, params, jnp.float32)

    # Run A: auto tile (one big tile).  Run B: forced 16-row tiles (3 grid
    # steps; exercises row padding and the pipelined grid).
    for tr in (None, 16):
        dos_out, scaling = lmbtr_dos_forward(x, params, tile_rows=tr, use_bf16=True)
        dos_out = jax.block_until_ready(dos_out)
        scaling = jax.block_until_ready(scaling)
        assert dos_out.shape == (N, OUT_DIM)
        assert scaling.shape == (N,)
        # Tight check vs a reference mirroring the kernel's bf16 matmuls
        # (+ bf16 output rounding).
        assert bool(jnp.allclose(dos_out, dos_bf, atol=1e-2, rtol=1e-2))
        assert bool(jnp.allclose(scaling, scal_bf, atol=1e-2, rtol=1e-2))
        # Loose sanity check vs the pure-f32 reference (bf16 rounding).
        assert bool(jnp.allclose(dos_out, dos_f32, atol=5e-2, rtol=5e-2))
        assert bool(jnp.allclose(scaling, scal_f32, atol=5e-2, rtol=5e-2))

    # Run C: output_dim == 1 branch of the module (dos returned flattened).
    params1 = _init_params(jax.random.PRNGKey(1), IN_DIM, DIM1, 1, 1)
    d1, s1 = lmbtr_dos_forward(x, params1, use_bf16=True)
    d1 = jax.block_until_ready(d1)
    s1 = jax.block_until_ready(s1)
    d1_ref, s1_ref = _reference_forward(x, params1, jnp.float32)
    assert d1.shape == (N,) and s1.shape == (N,)
    assert bool(jnp.allclose(d1, d1_ref, atol=5e-2, rtol=5e-2))
    assert bool(jnp.allclose(s1, s1_ref, atol=5e-2, rtol=5e-2))

    print("KERNEL_OK")
</pallas_src>

<mosaic_0001>
module attributes {stable_mosaic.version = 11 : i64} {
  func.func @_packed_kernel(%arg0: i32, %arg1: memref<48x16xbf16, #tpu.memory_space<vmem>>, %arg2: memref<16x32xbf16, #tpu.memory_space<vmem>>, %arg3: memref<1x32xf32, #tpu.memory_space<vmem>>, %arg4: memref<32x64xbf16, #tpu.memory_space<vmem>>, %arg5: memref<1x64xf32, #tpu.memory_space<vmem>>, %arg6: memref<1x64x64xbf16, #tpu.memory_space<vmem>>, %arg7: memref<1x1x64xf32, #tpu.memory_space<vmem>>, %arg8: memref<64x8xbf16, #tpu.memory_space<vmem>>, %arg9: memref<1x8xf32, #tpu.memory_space<vmem>>, %arg10: memref<48x8xbf16, #tpu.memory_space<vmem>>) attributes {dimension_semantics = [#tpu.dimension_semantics<parallel>], iteration_bounds = array<i64: 1>, scalar_prefetch = 0 : i64, scratch_operands = 0 : i64, tpu.core_type = #tpu.core_type<tc>, window_params = [{transform_indices = @transform_0, window_bounds = array<i64: 48, 16>}, {pipeline_mode = #tpu.pipeline_mode<synchronous>, transform_indices = @transform_1, window_bounds = array<i64: 16, 32>}, {pipeline_mode = #tpu.pipeline_mode<synchronous>, transform_indices = @transform_2, window_bounds = array<i64: 1, 32>}, {pipeline_mode = #tpu.pipeline_mode<synchronous>, transform_indices = @transform_3, window_bounds = array<i64: 32, 64>}, {pipeline_mode = #tpu.pipeline_mode<synchronous>, transform_indices = @transform_4, window_bounds = array<i64: 1, 64>}, {pipeline_mode = #tpu.pipeline_mode<synchronous>, transform_indices = @transform_5, window_bounds = array<i64: 1, 64, 64>}, {pipeline_mode = #tpu.pipeline_mode<synchronous>, transform_indices = @transform_6, window_bounds = array<i64: 1, 1, 64>}, {pipeline_mode = #tpu.pipeline_mode<synchronous>, transform_indices = @transform_7, window_bounds = array<i64: 64, 8>}, {pipeline_mode = #tpu.pipeline_mode<synchronous>, transform_indices = @transform_8, window_bounds = array<i64: 1, 8>}, {transform_indices = @transform_9, window_bounds = array<i64: 48, 8>}]} {
    %c0 = arith.constant 0 : index
    %c0_0 = arith.constant 0 : index
    %0 = vector.load %arg1[%c0, %c0_0] : memref<48x16xbf16, #tpu.memory_space<vmem>>, vector<48x16xbf16>
    %c0_1 = arith.constant 0 : index
    %c0_2 = arith.constant 0 : index
    %1 = vector.load %arg2[%c0_1, %c0_2] : memref<16x32xbf16, #tpu.memory_space<vmem>>, vector<16x32xbf16>
    %cst = arith.constant dense<0.000000e+00> : vector<48x32xf32>
    %2 = tpu.matmul %0, %1, %cst {dimension_numbers = #tpu.dot_dimension_numbers<[1], [0], [0], [1], [0, 0, 1, 1], [], []>} : vector<48x16xbf16>, vector<16x32xbf16>, vector<48x32xf32> -> vector<48x32xf32>
    %c0_3 = arith.constant 0 : index
    %c0_4 = arith.constant 0 : index
    %3 = vector.load %arg3[%c0_3, %c0_4] : memref<1x32xf32, #tpu.memory_space<vmem>>, vector<1x32xf32>
    %4 = vector.broadcast %3 : vector<1x32xf32> to vector<48x32xf32>
    %5 = arith.addf %2, %4 : vector<48x32xf32>
    %cst_5 = arith.constant 0.000000e+00 : f32
    %6 = vector.broadcast %cst_5 : f32 to vector<48x32xf32>
    %7 = arith.maximumf %5, %6 : vector<48x32xf32>
    %8 = arith.truncf %7 : vector<48x32xf32> to vector<48x32xbf16>
    %c0_6 = arith.constant 0 : index
    %c0_7 = arith.constant 0 : index
    %9 = vector.load %arg4[%c0_6, %c0_7] : memref<32x64xbf16, #tpu.memory_space<vmem>>, vector<32x64xbf16>
    %cst_8 = arith.constant dense<0.000000e+00> : vector<48x64xf32>
    %10 = tpu.matmul %8, %9, %cst_8 {dimension_numbers = #tpu.dot_dimension_numbers<[1], [0], [0], [1], [0, 0, 1, 1], [], []>} : vector<48x32xbf16>, vector<32x64xbf16>, vector<48x64xf32> -> vector<48x64xf32>
    %c0_9 = arith.constant 0 : index
    %c0_10 = arith.constant 0 : index
    %11 = vector.load %arg5[%c0_9, %c0_10] : memref<1x64xf32, #tpu.memory_space<vmem>>, vector<1x64xf32>
    %12 = vector.broadcast %11 : vector<1x64xf32> to vector<48x64xf32>
    %13 = arith.addf %10, %12 : vector<48x64xf32>
    %cst_11 = arith.constant 0.000000e+00 : f32
    %14 = vector.broadcast %cst_11 : f32 to vector<48x64xf32>
    %15 = arith.maximumf %13, %14 : vector<48x64xf32>
    %16 = arith.truncf %15 : vector<48x64xf32> to vector<48x64xbf16>
    %c0_12 = arith.constant 0 : index
    %c0_13 = arith.constant 0 : index
    %c0_14 = arith.constant 0 : index
    %17 = vector.load %arg6[%c0_12, %c0_13, %c0_14] : memref<1x64x64xbf16, #tpu.memory_space<vmem>>, vector<1x64x64xbf16>
    %18 = vector.shape_cast %17 : vector<1x64x64xbf16> to vector<64x64xbf16>
    %cst_15 = arith.constant dense<0.000000e+00> : vector<48x64xf32>
    %19 = tpu.matmul %16, %18, %cst_15 {dimension_numbers = #tpu.dot_dimension_numbers<[1], [0], [0], [1], [0, 0, 1, 1], [], []>} : vector<48x64xbf16>, vector<64x64xbf16>, vector<48x64xf32> -> vector<48x64xf32>
    %c0_16 = arith.constant 0 : index
    %c0_17 = arith.constant 0 : index
    %c0_18 = arith.constant 0 : index
    %20 = vector.load %arg7[%c0_16, %c0_17, %c0_18] : memref<1x1x64xf32, #tpu.memory_space<vmem>>, vector<1x1x64xf32>
    %21 = vector.shape_cast %20 : vector<1x1x64xf32> to vector<1x64xf32>
    %22 = vector.broadcast %21 : vector<1x64xf32> to vector<48x64xf32>
    %23 = arith.addf %19, %22 : vector<48x64xf32>
    %cst_19 = arith.constant 0.000000e+00 : f32
    %24 = vector.broadcast %cst_19 : f32 to vector<48x64xf32>
    %25 = arith.maximumf %23, %24 : vector<48x64xf32>
    %26 = arith.truncf %25 : vector<48x64xf32> to vector<48x64xbf16>
    %c0_20 = arith.constant 0 : index
    %c0_21 = arith.constant 0 : index
    %27 = vector.load %arg8[%c0_20, %c0_21] : memref<64x8xbf16, #tpu.memory_space<vmem>>, vector<64x8xbf16>
    %cst_22 = arith.constant dense<0.000000e+00> : vector<48x8xf32>
    %28 = tpu.matmul %26, %27, %cst_22 {dimension_numbers = #tpu.dot_dimension_numbers<[1], [0], [0], [1], [0, 0, 1, 1], [], []>} : vector<48x64xbf16>, vector<64x8xbf16>, vector<48x8xf32> -> vector<48x8xf32>
    %c0_23 = arith.constant 0 : index
    %c0_24 = arith.constant 0 : index
    %29 = vector.load %arg9[%c0_23, %c0_24] : memref<1x8xf32, #tpu.memory_space<vmem>>, vector<1x8xf32>
    %30 = vector.broadcast %29 : vector<1x8xf32> to vector<48x8xf32>
    %31 = arith.addf %28, %30 : vector<48x8xf32>
    %32 = arith.truncf %31 : vector<48x8xf32> to vector<48x8xbf16>
    %c0_25 = arith.constant 0 : index
    %c0_26 = arith.constant 0 : index
    %33 = vector.load %arg10[%c0_25, %c0_26] : memref<48x8xbf16, #tpu.memory_space<vmem>>, vector<48x8xbf16>
    tpu.vector_store %arg10[%c0_25, %c0_26], %32 {strides = array<i32>} : memref<48x8xbf16, #tpu.memory_space<vmem>>, vector<48x8xbf16>,
    return
  }
  func.func @transform_0(%arg0: i32) -> (i32, i32) {
    %c0_i32 = arith.constant 0 : i32
    %c0_i32_0 = arith.constant 0 : i32
    return %arg0, %c0_i32 : i32, i32
  }
  func.func @transform_1(%arg0: i32) -> (i32, i32) {
    %c0_i32 = arith.constant 0 : i32
    %c0_i32_0 = arith.constant 0 : i32
    %c0_i32_1 = arith.constant 0 : i32
    return %c0_i32, %c0_i32_0 : i32, i32
  }
  func.func @transform_2(%arg0: i32) -> (i32, i32) {
    %c0_i32 = arith.constant 0 : i32
    %c0_i32_0 = arith.constant 0 : i32
    %c0_i32_1 = arith.constant 0 : i32
    return %c0_i32, %c0_i32_0 : i32, i32
  }
  func.func @transform_3(%arg0: i32) -> (i32, i32) {
    %c0_i32 = arith.constant 0 : i32
    %c0_i32_0 = arith.constant 0 : i32
    %c0_i32_1 = arith.constant 0 : i32
    return %c0_i32, %c0_i32_0 : i32, i32
  }
  func.func @transform_4(%arg0: i32) -> (i32, i32) {
    %c0_i32 = arith.constant 0 : i32
    %c0_i32_0 = arith.constant 0 : i32
    %c0_i32_1 = arith.constant 0 : i32
    return %c0_i32, %c0_i32_0 : i32, i32
  }
  func.func @transform_5(%arg0: i32) -> (i32, i32, i32) {
    %c0_i32 = arith.constant 0 : i32
    %c0_i32_0 = arith.constant 0 : i32
    %c0_i32_1 = arith.constant 0 : i32
    %c0_i32_2 = arith.constant 0 : i32
    return %c0_i32, %c0_i32_0, %c0_i32_1 : i32, i32, i32
  }
  func.func @transform_6(%arg0: i32) -> (i32, i32, i32) {
    %c0_i32 = arith.constant 0 : i32
    %c0_i32_0 = arith.constant 0 : i32
    %c0_i32_1 = arith.constant 0 : i32
    %c0_i32_2 = arith.constant 0 : i32
    return %c0_i32, %c0_i32_0, %c0_i32_1 : i32, i32, i32
  }
  func.func @transform_7(%arg0: i32) -> (i32, i32) {
    %c0_i32 = arith.constant 0 : i32
    %c0_i32_0 = arith.constant 0 : i32
    %c0_i32_1 = arith.constant 0 : i32
    return %c0_i32, %c0_i32_0 : i32, i32
  }
  func.func @transform_8(%arg0: i32) -> (i32, i32) {
    %c0_i32 = arith.constant 0 : i32
    %c0_i32_0 = arith.constant 0 : i32
    %c0_i32_1 = arith.constant 0 : i32
    return %c0_i32, %c0_i32_0 : i32, i32
  }
  func.func @transform_9(%arg0: i32) -> (i32, i32) {
    %c0_i32 = arith.constant 0 : i32
    %c0_i32_0 = arith.constant 0 : i32
    return %arg0, %c0_i32 : i32, i32
  }
}

</mosaic_0001>

<llo_original>
// kernel: tpu_custom_call.1
$region0: #{tpu_custom_call.1}
  #allocation0 [shape = 'u32[]', space=smem, size = 0x4, offset = 0x4, fixed_abs, tag = 'smem constant byte address 0x4 - core index']
  #allocation1 [shape = 'u32[144,128]{1,0:T(1,128)}', space=vmem, size = 0x12000, scoped, tag = 'internal scratch']
  %s0 = inlined_call_operand.vmem [shape: bf16[48,16], index: 0, kind: input, shape index: {}]
  %s1 = inlined_call_operand.vmem [shape: bf16[16,32], index: 1, kind: input, shape index: {}]
  %s2 = inlined_call_operand.vmem [shape: f32[1,32], index: 2, kind: input, shape index: {}]
  %s3 = inlined_call_operand.vmem [shape: bf16[32,64], index: 3, kind: input, shape index: {}]
  %s4 = inlined_call_operand.vmem [shape: f32[1,64], index: 4, kind: input, shape index: {}]
  %s5 = inlined_call_operand.vmem [shape: bf16[1,64,64], index: 5, kind: input, shape index: {}]
  %s6 = inlined_call_operand.vmem [shape: f32[1,1,64], index: 6, kind: input, shape index: {}]
  %s7 = inlined_call_operand.vmem [shape: bf16[64,8], index: 7, kind: input, shape index: {}]
  %s8 = inlined_call_operand.vmem [shape: f32[1,8], index: 8, kind: input, shape index: {}]
  %s9 = inlined_call_operand.vmem [shape: bf16[48,8], index: 9, kind: output, shape index: {}]
  %s10 = sld [smem:[#allocation0]]
  $region46: #{tpu_custom_call.1} parent=0
    _
  %s12 = ssub.s32 1, %s10
  %s13 = scalar_select 0, %s12, %s10
  // Predicated region
  $region2: #{tpu_custom_call.1} parent=0 // pred_check
    _
  $region3: #{tpu_custom_call.1} parent=0 // pred_check_branch
    %15 = sbr.rel (0) target = $region5
  $region4: #{tpu_custom_call.1} parent=0 // pred_region
    _
  $region5: #{tpu_custom_call.1} parent=0 // pred_fallthru
    _
  // Predicated region
  $region6: #{tpu_custom_call.1} parent=0 // pred_check
    _
  $region7: #{tpu_custom_call.1} parent=0 // pred_check_branch
    %17 = sbr.rel (0) target = $region9
  $region8: #{tpu_custom_call.1} parent=0 // pred_region
    _
  $region9: #{tpu_custom_call.1} parent=0 // pred_fallthru
    _
  // Predicated region
  $region10: #{tpu_custom_call.1} parent=0 // pred_check
    _
  $region11: #{tpu_custom_call.1} parent=0 // pred_check_branch
    %19 = sbr.rel (0) target = $region13
  $region12: #{tpu_custom_call.1} parent=0 // pred_region
    _
  $region13: #{tpu_custom_call.1} parent=0 // pred_fallthru
    _
  // Predicated region
  $region14: #{tpu_custom_call.1} parent=0 // pred_check
    _
  $region15: #{tpu_custom_call.1} parent=0 // pred_check_branch
    %21 = sbr.rel (0) target = $region17
  $region16: #{tpu_custom_call.1} parent=0 // pred_region
    _
  $region17: #{tpu_custom_call.1} parent=0 // pred_fallthru
    _
  // Predicated region
  $region18: #{tpu_custom_call.1} parent=0 // pred_check
    _
  $region19: #{tpu_custom_call.1} parent=0 // pred_check_branch
    %23 = sbr.rel (0) target = $region21
  $region20: #{tpu_custom_call.1} parent=0 // pred_region
    _
  $region21: #{tpu_custom_call.1} parent=0 // pred_fallthru
    _
  // Predicated region
  $region22: #{tpu_custom_call.1} parent=0 // pred_check
    _
  $region23: #{tpu_custom_call.1} parent=0 // pred_check_branch
    %25 = sbr.rel (0) target = $region25
  $region24: #{tpu_custom_call.1} parent=0 // pred_region
    _
  $region25: #{tpu_custom_call.1} parent=0 // pred_fallthru
    _
  // Predicated region
  $region26: #{tpu_custom_call.1} parent=0 // pred_check
    _
  $region27: #{tpu_custom_call.1} parent=0 // pred_check_branch
    %27 = sbr.rel (0) target = $region29
  $region28: #{tpu_custom_call.1} parent=0 // pred_region
    _
  $region29: #{tpu_custom_call.1} parent=0 // pred_fallthru
    _
  // Predicated region
  $region30: #{tpu_custom_call.1} parent=0 // pred_check
    _
  $region31: #{tpu_custom_call.1} parent=0 // pred_check_branch
    %29 = sbr.rel (0) target = $region33
  $region32: #{tpu_custom_call.1} parent=0 // pred_region
    _
  $region33: #{tpu_custom_call.1} parent=0 // pred_fallthru
    _
  // Predicated region
  $region34: #{tpu_custom_call.1} parent=0 // pred_check
    _
  $region35: #{tpu_custom_call.1} parent=0 // pred_check_branch
    %31 = sbr.rel (0) target = $region37
  $region36: #{tpu_custom_call.1} parent=0 // pred_region
    _
  $region37: #{tpu_custom_call.1} parent=0 // pred_fallthru
    _
  %v33 = vld [vmem:[%s0] sm:$0xf]
  %v34 = vld [vmem:[%s0 + $0x4] sm:$0xf]
  %v35 = vld [vmem:[%s0 + $0x8] sm:$0xf]
  %v36 = vld [vmem:[%s0 + $0xc] sm:$0xf]
  %v37 = vld [vmem:[%s0 + $0x10] sm:$0xf]
  %v38 = vld [vmem:[%s0 + $0x14] sm:$0xf]
  %v39 = vld [vmem:[%s1] sm:$0xf]
  %v40 = vld [vmem:[%s1 + $0x4] sm:$0xf]
  %v41 = vld [vmem:[%s2] sm:$0x1]
  %v43 = vlaneseq
  %v44 = vshrl.u32 %v43, 7
  %v45 = vsub.s32 0, %v44
  %v46 = vrot.slane %v41, %v45
  %v54 = vunpack.c.l.b16 %v33
  %v55 = vunpack.c.l.b16 %v34
  %v56 = vunpack.c.l.b16 %v35
  %v57 = vunpack.c.l.b16 %v36
  %v58 = vunpack.c.l.b16 %v37
  %v59 = vunpack.c.l.b16 %v38
  %v60 = vpack.c.b16 %v55, %v54
  %v61 = vpack.c.b16 %v57, %v56
  %v62 = vpack.c.b16 %v59, %v58
  %v65 = vunpack.c.l.b16 %v39
  %v66 = vunpack.c.l.b16 %v40
  %v67 = vpack.c.b16 %v66, %v65
  %vm69 = vcmask 130048
  %v71 = vsel %vm69, %v60, 0
  %v74 = vsel %vm69, %v61, 0
  %v77 = vsel %vm69, %v62, 0
  %79 = vmatprep.subr.bf16.mxu0 0
  %80 = vmatpush1.bf16.msra.mxu0 0
  %81 = vmatprep.subr.bf16.mxu0 0
  %82 = vmatpush1.bf16.msra.mxu0 0
  %83 = vmatprep.subr.bf16.mxu0 0
  %84 = vmatpush1.bf16.msra.mxu0 0
  %85 = vmatprep.subr.bf16.mxu0 0
  %86 = vmatpush1.bf16.msra.mxu0 0
  %87 = vmatprep.subr.bf16.mxu0 0
  %88 = vmatpush1.bf16.msra.mxu0 0
  %89 = vmatprep.subr.bf16.mxu0 0
  %90 = vmatpush1.bf16.msra.mxu0 0
  %91 = vmatprep.subr.bf16.mxu0 0
  %92 = vmatpush1.bf16.msra.mxu0 0
  %93 = vmatprep.subr.bf16.mxu0 0
  %94 = vmatpush1.bf16.msra.mxu0 %v67
  %95 = vmatprep.subr.bf16.mxu0 0
  %96 = vmatpush2.bf16.msra.mxu0 0
  %97 = vmatprep.subr.bf16.mxu0 0
  %98 = vmatpush2.bf16.msra.mxu0 0
  %99 = vmatprep.subr.bf16.mxu0 0
  %100 = vmatpush2.bf16.msra.mxu0 0
  %101 = vmatprep.subr.bf16.mxu0 0
  %102 = vmatpush2.bf16.msra.mxu0 0
  %103 = vmatprep.subr.bf16.mxu0 0
  %104 = vmatpush2.bf16.msra.mxu0 0
  %105 = vmatprep.subr.bf16.mxu0 0
  %106 = vmatpush2.bf16.msra.mxu0 0
  %107 = vmatprep.subr.bf16.mxu0 0
  %108 = vmatpush2.bf16.msra.mxu0 0
  %109 = vmatprep.subr.bf16.mxu0 0
  %110 = vmatpush2.bf16.msra.mxu0 0
  %111 = vmatprep.mubr.bf16.mxu0 0
  %112 = vmatmul.mubr.bf16.gmra.mxu0 %v71
  %v113 = vpop.f32.mrf.mxu0
  %v114 = vadd.f32 %v46, %v113
  %v115 = vpop.f32.mrf.mxu0
  %v116 = vpop.f32.mrf.mxu0
  %v117 = vadd.f32 %v46, %v116
  %v118 = vpop.f32.mrf.mxu0
  %119 = vmatprep.mubr.bf16.mxu0 0
  %120 = vmatmul.mubr.bf16.gmra.mxu0 %v74
  %v121 = vpop.f32.mrf.mxu0
  %v122 = vadd.f32 %v46, %v121
  %v123 = vpop.f32.mrf.mxu0
  %v124 = vpop.f32.mrf.mxu0
  %v125 = vadd.f32 %v46, %v124
  %v126 = vpop.f32.mrf.mxu0
  %127 = vmatprep.mubr.bf16.mxu0 0
  %128 = vmatmul.mubr.bf16.gmra.mxu0 %v77
  %v129 = vpop.f32.mrf.mxu0
  %v130 = vadd.f32 %v46, %v129
  %v131 = vpop.f32.mrf.mxu0
  %v132 = vpop.f32.mrf.mxu0
  %v133 = vadd.f32 %v46, %v132
  %v134 = vpop.f32.mrf.mxu0
  %135 = vdwg.mxu0
  %v136 = vmax.f32 %v114, 0.0
  %v137 = vmax.f32 %v117, 0.0
  %v138 = vmax.f32 %v122, 0.0
  %v139 = vmax.f32 %v125, 0.0
  %v140 = vmax.f32 %v130, 0.0
  %v141 = vmax.f32 %v133, 0.0
  %v142 = vpack.c.bf16 %v137, %v136
  %v143 = vpack.c.bf16 %v139, %v138
  %v144 = vpack.c.bf16 %v141, %v140
  %v145 = vld [vmem:[%s3] sm:$0xf]
  %v146 = vld [vmem:[%s3 + $0x4] sm:$0xf]
  %v147 = vld [vmem:[%s3 + $0x8] sm:$0xf]
  %v148 = vld [vmem:[%s3 + $0xc] sm:$0xf]
  %v149 = vld [vmem:[%s4] sm:$0x1]
  %v151 = vlaneseq
  %v152 = vshrl.u32 %v151, 7
  %v153 = vsub.s32 0, %v152
  %v154 = vrot.slane %v149, %v153
  %v160 = vunpack.c.l.b16 %v145
  %v161 = vunpack.c.l.b16 %v146
  %v162 = vunpack.c.l.b16 %v147
  %v163 = vunpack.c.l.b16 %v148
  %v164 = vpack.c.b16 %v161, %v160
  %v165 = vpack.c.b16 %v163, %v162
  %vm168 = vcmask 261120
  %v170 = vsel %vm168, %v142, 0
  %v173 = vsel %vm168, %v143, 0
  %v176 = vsel %vm168, %v144, 0
  %178 = vmatprep.subr.bf16.mxu0 0
  %179 = vmatpush1.bf16.msra.mxu0 0
  %180 = vmatprep.subr.bf16.mxu0 0
  %181 = vmatpush1.bf16.msra.mxu0 0
  %182 = vmatprep.subr.bf16.mxu0 0
  %183 = vmatpush1.bf16.msra.mxu0 0
  %184 = vmatprep.subr.bf16.mxu0 0
  %185 = vmatpush1.bf16.msra.mxu0 0
  %186 = vmatprep.subr.bf16.mxu0 0
  %187 = vmatpush1.bf16.msra.mxu0 0
  %188 = vmatprep.subr.bf16.mxu0 0
  %189 = vmatpush1.bf16.msra.mxu0 0
  %190 = vmatprep.subr.bf16.mxu0 0
  %191 = vmatpush1.bf16.msra.mxu0 %v165
  %192 = vmatprep.subr.bf16.mxu0 0
  %193 = vmatpush1.bf16.msra.mxu0 %v164
  %194 = vmatprep.subr.bf16.mxu0 0
  %195 = vmatpush2.bf16.msra.mxu0 0
  %196 = vmatprep.subr.bf16.mxu0 0
  %197 = vmatpush2.bf16.msra.mxu0 0
  %198 = vmatprep.subr.bf16.mxu0 0
  %199 = vmatpush2.bf16.msra.mxu0 0
  %200 = vmatprep.subr.bf16.mxu0 0
  %201 = vmatpush2.bf16.msra.mxu0 0
  %202 = vmatprep.subr.bf16.mxu0 0
  %203 = vmatpush2.bf16.msra.mxu0 0
  %204 = vmatprep.subr.bf16.mxu0 0
  %205 = vmatpush2.bf16.msra.mxu0 0
  %206 = vmatprep.subr.bf16.mxu0 0
  %207 = vmatpush2.bf16.msra.mxu0 0
  %208 = vmatprep.subr.bf16.mxu0 0
  %209 = vmatpush2.bf16.msra.mxu0 0
  %210 = vmatprep.mubr.bf16.mxu0 0
  %211 = vmatmul.mubr.bf16.gmra.mxu0 %v170
  %v212 = vpop.f32.mrf.mxu0
  %v213 = vadd.f32 %v154, %v212
  %v214 = vpop.f32.mrf.mxu0
  %v215 = vpop.f32.mrf.mxu0
  %v216 = vadd.f32 %v154, %v215
  %v217 = vpop.f32.mrf.mxu0
  %218 = vmatprep.mubr.bf16.mxu0 0
  %219 = vmatmul.mubr.bf16.gmra.mxu0 %v173
  %v220 = vpop.f32.mrf.mxu0
  %v221 = vadd.f32 %v154, %v220
  %v222 = vpop.f32.mrf.mxu0
  %v223 = vpop.f32.mrf.mxu0
  %v224 = vadd.f32 %v154, %v223
  %v225 = vpop.f32.mrf.mxu0
  %226 = vmatprep.mubr.bf16.mxu0 0
  %227 = vmatmul.mubr.bf16.gmra.mxu0 %v176
  %v228 = vpop.f32.mrf.mxu0
  %v229 = vadd.f32 %v154, %v228
  %v230 = vpop.f32.mrf.mxu0
  %v231 = vpop.f32.mrf.mxu0
  %v232 = vadd.f32 %v154, %v231
  %v233 = vpop.f32.mrf.mxu0
  %234 = vdwg.mxu0
  %v235 = vmax.f32 %v213, 0.0
  %v236 = vmax.f32 %v216, 0.0
  %v237 = vmax.f32 %v221, 0.0
  %v238 = vmax.f32 %v224, 0.0
  %v239 = vmax.f32 %v229, 0.0
  %v240 = vmax.f32 %v232, 0.0
  %v241 = vpack.c.bf16 %v236, %v235
  %v242 = vpack.c.bf16 %v238, %v237
  %v243 = vpack.c.bf16 %v240, %v239
  %v244 = vld [vmem:[%s5] sm:$0xf]
  %v245 = vld [vmem:[%s5 + $0x4] sm:$0xf]
  %v246 = vld [vmem:[%s5 + $0x8] sm:$0xf]
  %v247 = vld [vmem:[%s5 + $0xc] sm:$0xf]
  %v248 = vld [vmem:[%s5 + $0x10] sm:$0xf]
  %v249 = vld [vmem:[%s5 + $0x14] sm:$0xf]
  %v250 = vld [vmem:[%s5 + $0x18] sm:$0xf]
  %v251 = vld [vmem:[%s5 + $0x1c] sm:$0xf]
  %v252 = vld [vmem:[%s6] sm:$0x1]
  %v254 = vlaneseq
  %v255 = vshrl.u32 %v254, 7
  %v256 = vsub.s32 0, %v255
  %v257 = vrot.slane %v252, %v256
  %v267 = vunpack.c.l.b16 %v244
  %v268 = vunpack.c.l.b16 %v245
  %v269 = vunpack.c.l.b16 %v246
  %v270 = vunpack.c.l.b16 %v247
  %v271 = vunpack.c.l.b16 %v248
  %v272 = vunpack.c.l.b16 %v249
  %v273 = vunpack.c.l.b16 %v250
  %v274 = vunpack.c.l.b16 %v251
  %v275 = vpack.c.b16 %v268, %v267
  %v276 = vpack.c.b16 %v270, %v269
  %v277 = vpack.c.b16 %v272, %v271
  %v278 = vpack.c.b16 %v274, %v273
  %vm283 = vcmask 523264
  %v285 = vsel %vm283, %v241, 0
  %v288 = vsel %vm283, %v242, 0
  %v291 = vsel %vm283, %v243, 0
  %293 = vmatprep.subr.bf16.mxu0 0
  %294 = vmatpush1.bf16.msra.mxu0 0
  %295 = vmatprep.subr.bf16.mxu0 0
  %296 = vmatpush1.bf16.msra.mxu0 0
  %297 = vmatprep.subr.bf16.mxu0 0
  %298 = vmatpush1.bf16.msra.mxu0 0
  %299 = vmatprep.subr.bf16.mxu0 0
  %300 = vmatpush1.bf16.msra.mxu0 0
  %301 = vmatprep.subr.bf16.mxu0 0
  %302 = vmatpush1.bf16.msra.mxu0 %v278
  %303 = vmatprep.subr.bf16.mxu0 0
  %304 = vmatpush1.bf16.msra.mxu0 %v277
  %305 = vmatprep.subr.bf16.mxu0 0
  %306 = vmatpush1.bf16.msra.mxu0 %v276
  %307 = vmatprep.subr.bf16.mxu0 0
  %308 = vmatpush1.bf16.msra.mxu0 %v275
  %309 = vmatprep.subr.bf16.mxu0 0
  %310 = vmatpush2.bf16.msra.mxu0 0
  %311 = vmatprep.subr.bf16.mxu0 0
  %312 = vmatpush2.bf16.msra.mxu0 0
  %313 = vmatprep.subr.bf16.mxu0 0
  %314 = vmatpush2.bf16.msra.mxu0 0
  %315 = vmatprep.subr.bf16.mxu0 0
  %316 = vmatpush2.bf16.msra.mxu0 0
  %317 = vmatprep.subr.bf16.mxu0 0
  %318 = vmatpush2.bf16.msra.mxu0 0
  %319 = vmatprep.subr.bf16.mxu0 0
  %320 = vmatpush2.bf16.msra.mxu0 0
  %321 = vmatprep.subr.bf16.mxu0 0
  %322 = vmatpush2.bf16.msra.mxu0 0
  %323 = vmatprep.subr.bf16.mxu0 0
  %324 = vmatpush2.bf16.msra.mxu0 0
  %325 = vmatprep.mubr.bf16.mxu0 0
  %326 = vmatmul.mubr.bf16.gmra.mxu0 %v285
  %v327 = vpop.f32.mrf.mxu0
  %v328 = vadd.f32 %v257, %v327
  %v329 = vpop.f32.mrf.mxu0
  %v330 = vpop.f32.mrf.mxu0
  %v331 = vadd.f32 %v257, %v330
  %v332 = vpop.f32.mrf.mxu0
  %333 = vmatprep.mubr.bf16.mxu0 0
  %334 = vmatmul.mubr.bf16.gmra.mxu0 %v288
  %v335 = vpop.f32.mrf.mxu0
  %v336 = vadd.f32 %v257, %v335
  %v337 = vpop.f32.mrf.mxu0
  %v338 = vpop.f32.mrf.mxu0
  %v339 = vadd.f32 %v257, %v338
  %v340 = vpop.f32.mrf.mxu0
  %341 = vmatprep.mubr.bf16.mxu0 0
  %342 = vmatmul.mubr.bf16.gmra.mxu0 %v291
  %v343 = vpop.f32.mrf.mxu0
  %v344 = vadd.f32 %v257, %v343
  %v345 = vpop.f32.mrf.mxu0
  %v346 = vpop.f32.mrf.mxu0
  %v347 = vadd.f32 %v257, %v346
  %v348 = vpop.f32.mrf.mxu0
  %349 = vdwg.mxu0
  %v350 = vmax.f32 %v328, 0.0
  %v351 = vmax.f32 %v331, 0.0
  %v352 = vmax.f32 %v336, 0.0
  %v353 = vmax.f32 %v339, 0.0
  %v354 = vmax.f32 %v344, 0.0
  %v355 = vmax.f32 %v347, 0.0
  %v356 = vpack.c.bf16 %v351, %v350
  %v357 = vpack.c.bf16 %v353, %v352
  %v358 = vpack.c.bf16 %v355, %v354
  %v359 = vld [vmem:[%s7] sm:$0xf]
  %v360 = vld [vmem:[%s7 + $0x4] sm:$0xf]
  %v361 = vld [vmem:[%s7 + $0x8] sm:$0xf]
  %v362 = vld [vmem:[%s7 + $0xc] sm:$0xf]
  %v363 = vld [vmem:[%s7 + $0x10] sm:$0xf]
  %v364 = vld [vmem:[%s7 + $0x14] sm:$0xf]
  %v365 = vld [vmem:[%s7 + $0x18] sm:$0xf]
  %v366 = vld [vmem:[%s7 + $0x1c] sm:$0xf]
  %v367 = vld [vmem:[%s8] sm:$0x1]
  %v369 = vlaneseq
  %v370 = vshrl.u32 %v369, 7
  %v371 = vsub.s32 0, %v370
  %v372 = vrot.slane %v367, %v371
  %v382 = vunpack.c.l.b16 %v359
  %v383 = vunpack.c.l.b16 %v360
  %v384 = vunpack.c.l.b16 %v361
  %v385 = vunpack.c.l.b16 %v362
  %v386 = vunpack.c.l.b16 %v363
  %v387 = vunpack.c.l.b16 %v364
  %v388 = vunpack.c.l.b16 %v365
  %v389 = vunpack.c.l.b16 %v366
  %v390 = vpack.c.b16 %v383, %v382
  %v391 = vpack.c.b16 %v385, %v384
  %v392 = vpack.c.b16 %v387, %v386
  %v393 = vpack.c.b16 %v389, %v388
  %v399 = vsel %vm283, %v356, 0
  %v402 = vsel %vm283, %v357, 0
  %v405 = vsel %vm283, %v358, 0
  %407 = vmatprep.subr.bf16.mxu0 0
  %408 = vmatpush1.bf16.msra.mxu0 0
  %409 = vmatprep.subr.bf16.mxu0 0
  %410 = vmatpush1.bf16.msra.mxu0 0
  %411 = vmatprep.subr.bf16.mxu0 0
  %412 = vmatpush1.bf16.msra.mxu0 0
  %413 = vmatprep.subr.bf16.mxu0 0
  %414 = vmatpush1.bf16.msra.mxu0 0
  %415 = vmatprep.subr.bf16.mxu0 0
  %416 = vmatpush1.bf16.msra.mxu0 %v393
  %417 = vmatprep.subr.bf16.mxu0 0
  %418 = vmatpush1.bf16.msra.mxu0 %v392
  %419 = vmatprep.subr.bf16.mxu0 0
  %420 = vmatpush1.bf16.msra.mxu0 %v391
  %421 = vmatprep.subr.bf16.mxu0 0
  %422 = vmatpush1.bf16.msra.mxu0 %v390
  %423 = vmatprep.subr.bf16.mxu0 0
  %424 = vmatpush2.bf16.msra.mxu0 0
  %425 = vmatprep.subr.bf16.mxu0 0
  %426 = vmatpush2.bf16.msra.mxu0 0
  %427 = vmatprep.subr.bf16.mxu0 0
  %428 = vmatpush2.bf16.msra.mxu0 0
  %429 = vmatprep.subr.bf16.mxu0 0
  %430 = vmatpush2.bf16.msra.mxu0 0
  %431 = vmatprep.subr.bf16.mxu0 0
  %432 = vmatpush2.bf16.msra.mxu0 0
  %433 = vmatprep.subr.bf16.mxu0 0
  %434 = vmatpush2.bf16.msra.mxu0 0
  %435 = vmatprep.subr.bf16.mxu0 0
  %436 = vmatpush2.bf16.msra.mxu0 0
  %437 = vmatprep.subr.bf16.mxu0 0
  %438 = vmatpush2.bf16.msra.mxu0 0
  %439 = vmatprep.mubr.bf16.mxu0 0
  %440 = vmatmul.mubr.bf16.gmra.mxu0 %v399
  %v441 = vpop.f32.mrf.mxu0
  %v442 = vadd.f32 %v372, %v441
  %v443 = vpop.f32.mrf.mxu0
  %v444 = vpop.f32.mrf.mxu0
  %v445 = vadd.f32 %v372, %v444
  %v446 = vpop.f32.mrf.mxu0
  %447 = vmatprep.mubr.bf16.mxu0 0
  %448 = vmatmul.mubr.bf16.gmra.mxu0 %v402
  %v449 = vpop.f32.mrf.mxu0
  %v450 = vadd.f32 %v372, %v449
  %v451 = vpop.f32.mrf.mxu0
  %v452 = vpop.f32.mrf.mxu0
  %v453 = vadd.f32 %v372, %v452
  %v454 = vpop.f32.mrf.mxu0
  %455 = vmatprep.mubr.bf16.mxu0 0
  %456 = vmatmul.mubr.bf16.gmra.mxu0 %v405
  %v457 = vpop.f32.mrf.mxu0
  %v458 = vadd.f32 %v372, %v457
  %v459 = vpop.f32.mrf.mxu0
  %v460 = vpop.f32.mrf.mxu0
  %v461 = vadd.f32 %v372, %v460
  %v462 = vpop.f32.mrf.mxu0
  %463 = vdwg.mxu0
  %v464 = vpack.c.bf16 %v445, %v442
  %v465 = vpack.c.bf16 %v453, %v450
  %v466 = vpack.c.bf16 %v461, %v458
  %v470 = vunpack.c.l.b16 %v464
  %v471 = vunpack.c.h.b16 %v464
  %v472 = vunpack.c.l.b16 %v465
  %v473 = vunpack.c.h.b16 %v465
  %v474 = vunpack.c.l.b16 %v466
  %v475 = vunpack.c.h.b16 %v466
  %v476 = vpack.c.b16 %v470, %v470
  %v477 = vpack.c.b16 %v471, %v471
  %v478 = vpack.c.b16 %v472, %v472
  %v479 = vpack.c.b16 %v473, %v473
  %v480 = vpack.c.b16 %v474, %v474
  %v481 = vpack.c.b16 %v475, %v475
  %vm488 = vcmask 60416
  %489 = vst.msk [vmem:[%s9] sm:$0xf] %vm488, %v476
  %490 = vst.msk [vmem:[%s9 + $0x4] sm:$0xf] %vm488, %v477
  %491 = vst.msk [vmem:[%s9 + $0x8] sm:$0xf] %vm488, %v478
  %492 = vst.msk [vmem:[%s9 + $0xc] sm:$0xf] %vm488, %v479
  %493 = vst.msk [vmem:[%s9 + $0x10] sm:$0xf] %vm488, %v480
  %494 = vst.msk [vmem:[%s9 + $0x14] sm:$0xf] %vm488, %v481
  // Predicated region
  $region38: #{tpu_custom_call.1} parent=0 // pred_check
    _
  $region39: #{tpu_custom_call.1} parent=0 // pred_check_branch
    %496 = sbr.rel (0) target = $region41
  $region40: #{tpu_custom_call.1} parent=0 // pred_region
    _
  $region41: #{tpu_custom_call.1} parent=0 // pred_fallthru
    _
  // Predicated region
  $region42: #{tpu_custom_call.1} parent=0 // pred_check
    _
  $region43: #{tpu_custom_call.1} parent=0 // pred_check_branch
    %498 = sbr.rel (0) target = $region45
  $region44: #{tpu_custom_call.1} parent=0 // pred_region
    _
  $region45: #{tpu_custom_call.1} parent=0 // pred_fallthru
    _

</llo_original>
